<compile_context>
chip_gen: v6e
topology: v6e:2x2x1
jax: 0.10.0
libtpu: 0.0.40
codegen_flags: <defaults>
</compile_context>

<pallas_src>
import functools

import jax
import jax.numpy as jnp
from jax.experimental import pallas as pl
from jax.experimental.pallas import tpu as pltpu


def _round_up(x, m):
    return ((x + m - 1) // m) * m


def _largest_divisor_tile(dim, candidates=(512, 256, 128)):
    """Largest candidate tile that divides `dim` (dim is a multiple of 128)."""
    for c in candidates:
        if dim % c == 0:
            return c
    return dim


def _linear_kernel(x_ref, w_ref, b_ref, o_ref):
    # x_ref: (tm, tk) operand-dtype, w_ref: (tk, tn) operand-dtype,
    # b_ref: (1, tn) f32, o_ref: (tm, tn) f32 (doubles as the accumulator).
    k = pl.program_id(2)
    partial = jnp.dot(
        x_ref[...], w_ref[...], preferred_element_type=jnp.float32
    )

    @pl.when(k == 0)
    def _():
        # First K block: initialize the resident output tile; fold the bias in
        # here so the common single-K-block case is one write.
        o_ref[...] = partial + b_ref[...]

    @pl.when(k != 0)
    def _():
        o_ref[...] += partial


@functools.partial(jax.jit, static_argnames=("tm", "tn", "tk"))
def _linear_pallas(x_p, w_t_p, b_p, *, tm, tn, tk):
    """x_p: (B, INp), w_t_p: (INp, OUTp), b_p: (1, OUTp) -> (B, OUTp) f32."""
    B, INp = x_p.shape
    OUTp = w_t_p.shape[1]
    grid = (pl.cdiv(B, tm), OUTp // tn, INp // tk)
    return pl.pallas_call(
        _linear_kernel,
        out_shape=jax.ShapeDtypeStruct((B, OUTp), jnp.float32),
        grid=grid,
        in_specs=[
            pl.BlockSpec((tm, tk), lambda i, j, k: (i, k)),
            pl.BlockSpec((tk, tn), lambda i, j, k: (k, j)),
            pl.BlockSpec((1, tn), lambda i, j, k: (0, j)),
        ],
        out_specs=pl.BlockSpec((tm, tn), lambda i, j, k: (i, j)),
        compiler_params=pltpu.CompilerParams(
            dimension_semantics=("parallel", "parallel", "arbitrary"),
            vmem_limit_bytes=48 * 1024 * 1024,
        ),
    )(x_p, w_t_p, b_p)


class PallasLinear:
    """nn.Linear-equivalent forward; parameters prepared once at init."""

    _TM_BUCKETS = (8, 16, 32, 64, 128, 256, 512)
    _K_SINGLE_BLOCK_MAX = 512  # full-K block (no x padding) up to this size

    def __init__(self, weight, bias, use_bf16=True):
        # weight: (OUT, IN) PyTorch layout; bias: (OUT,)
        OUT, IN = weight.shape
        self.in_features = IN
        self.out_features = OUT
        self.operand_dtype = jnp.bfloat16 if use_bf16 else jnp.float32

        # K (reduction) axis: single full-dim block when small (no padding of
        # x ever needed), otherwise tile a 128-rounded K.
        if IN <= self._K_SINGLE_BLOCK_MAX:
            self.in_padded = IN
            self.tk = IN
        else:
            self.in_padded = _round_up(IN, 128)
            self.tk = _largest_divisor_tile(self.in_padded)

        # N (output) axis: lane-dense, padded to a multiple of 128; tile is a
        # divisor of the padded dim so no extra rounding waste.
        self.out_padded = _round_up(OUT, 128)
        self.tn = _largest_divisor_tile(self.out_padded)

        # Hoisted to init: transpose to (IN, OUT), zero-pad, cast to the MXU
        # operand dtype.  No per-call HBM->HBM transpose/pad copies.
        w = jnp.asarray(weight, jnp.float32)
        self.w_t = (
            jnp.zeros((self.in_padded, self.out_padded), self.operand_dtype)
            .at[:IN, :OUT]
            .set(w.T.astype(self.operand_dtype))
        )
        # Bias stays f32: it is added to the f32 accumulator/output.
        self.b2d = (
            jnp.zeros((1, self.out_padded), jnp.float32)
            .at[0, :OUT]
            .set(jnp.asarray(bias, jnp.float32))
        )

    def _pick_tm(self, B):
        for b in self._TM_BUCKETS:
            if b >= B:
                tm = b
                break
        else:
            # Large batch: bf16 operands let tm grow to 1024 and still fit
            # comfortably under v5e's 16 MiB scoped / v7x's 64 MiB physical.
            tm = 1024 if (self.operand_dtype == jnp.bfloat16 and B >= 1024) else 512
        # v7x megacore: if the whole problem collapses to one (i,j) block with
        # non-trivial tiles, split M so both TensorCores get a block.
        if tm >= 256 and pl.cdiv(B, tm) * (self.out_padded // self.tn) == 1:
            tm //= 2
        return tm

    def __call__(self, x):
        B, IN = x.shape
        assert IN == self.in_features
        tm = self._pick_tm(B)

        if self.in_padded == IN:
            # Ragged batch tail is handled by masked trailing M blocks inside
            # the pipeline; no host-side padding copy of the activation.
            x_p = x.astype(self.operand_dtype)
        else:
            # K must be explicitly zero-padded: garbage K columns would be
            # accumulated into valid outputs.
            x_p = (
                jnp.zeros((B, self.in_padded), self.operand_dtype)
                .at[:, :IN]
                .set(x.astype(self.operand_dtype))
            )

        y_p = _linear_pallas(x_p, self.w_t, self.b2d,
                             tm=tm, tn=self.tn, tk=self.tk)
        return y_p[:, : self.out_features]


if __name__ == "__main__":
    # Deterministic parameter init mimicking nn.Linear(input_size, output_size):
    # U(-1/sqrt(input_size), 1/sqrt(input_size)) for weight and bias.
    input_size = 8
    output_size = 4
    batch = 16

    key = jax.random.PRNGKey(0)
    k_x, k_w, k_b = jax.random.split(key, 3)

    bound = 1.0 / (input_size ** 0.5)
    weight = jax.random.uniform(
        k_w, (output_size, input_size), jnp.float32, -bound, bound
    )
    bias = jax.random.uniform(
        k_b, (output_size,), jnp.float32, -bound, bound
    )
    x = jax.random.normal(k_x, (batch, input_size), jnp.float32)

    # Plain JAX reference (nn.Linear semantics).
    y_ref = x @ weight.T + bias

    # Default bf16-operand fast path (MXU-native on v5e/v6e/v7x), f32 accum.
    linear_bf16 = PallasLinear(weight, bias, use_bf16=True)
    y_bf16 = jax.block_until_ready(linear_bf16(x))
    assert y_bf16.shape == (batch, output_size)
    assert jnp.allclose(y_bf16, y_ref, atol=2e-2, rtol=2e-2)

    # f32 "exact" mode behind the flag: bit-tight vs the f32 reference.
    linear_f32 = PallasLinear(weight, bias, use_bf16=False)
    y_f32 = jax.block_until_ready(linear_f32(x))
    assert y_f32.shape == (batch, output_size)
    assert jnp.allclose(y_f32, y_ref, atol=1e-5, rtol=1e-5)

    print("KERNEL_OK")
</pallas_src>

<mosaic_0001>
module attributes {stable_mosaic.version = 11 : i64} {
  func.func @_linear_kernel(%arg0: i32, %arg1: i32, %arg2: i32, %arg3: memref<16x8xbf16, #tpu.memory_space<vmem>>, %arg4: memref<8x128xbf16, #tpu.memory_space<vmem>>, %arg5: memref<1x128xf32, #tpu.memory_space<vmem>>, %arg6: memref<16x128xf32, #tpu.memory_space<vmem>>) attributes {dimension_semantics = [#tpu.dimension_semantics<parallel>, #tpu.dimension_semantics<parallel>, #tpu.dimension_semantics<arbitrary>], iteration_bounds = array<i64: 1, 1, 1>, scalar_prefetch = 0 : i64, scratch_operands = 0 : i64, tpu.core_type = #tpu.core_type<tc>, window_params = [{transform_indices = @transform_0, window_bounds = array<i64: 16, 8>}, {transform_indices = @transform_1, window_bounds = array<i64: 8, 128>}, {transform_indices = @transform_2, window_bounds = array<i64: 1, 128>}, {transform_indices = @transform_3, window_bounds = array<i64: 16, 128>}]} {
    %c0 = arith.constant 0 : index
    %c0_0 = arith.constant 0 : index
    %0 = vector.load %arg3[%c0, %c0_0] : memref<16x8xbf16, #tpu.memory_space<vmem>>, vector<16x8xbf16>
    %c0_1 = arith.constant 0 : index
    %c0_2 = arith.constant 0 : index
    %1 = vector.load %arg4[%c0_1, %c0_2] : memref<8x128xbf16, #tpu.memory_space<vmem>>, vector<8x128xbf16>
    %cst = arith.constant dense<0.000000e+00> : vector<16x128xf32>
    %2 = tpu.matmul %0, %1, %cst {dimension_numbers = #tpu.dot_dimension_numbers<[1], [0], [0], [1], [0, 0, 1, 1], [], []>} : vector<16x8xbf16>, vector<8x128xbf16>, vector<16x128xf32> -> vector<16x128xf32>
    %c0_i32 = arith.constant 0 : i32
    %3 = arith.cmpi eq, %arg2, %c0_i32 : i32
    %4 = arith.extui %3 : i1 to i32
    %c0_i32_3 = arith.constant 0 : i32
    %5 = arith.cmpi ne, %4, %c0_i32_3 : i32
    scf.if %5 {
      %c0_6 = arith.constant 0 : index
      %c0_7 = arith.constant 0 : index
      %9 = vector.load %arg5[%c0_6, %c0_7] : memref<1x128xf32, #tpu.memory_space<vmem>>, vector<1x128xf32>
      %10 = vector.broadcast %9 : vector<1x128xf32> to vector<16x128xf32>
      %11 = arith.addf %2, %10 : vector<16x128xf32>
      %c0_8 = arith.constant 0 : index
      %c0_9 = arith.constant 0 : index
      %12 = vector.load %arg6[%c0_8, %c0_9] : memref<16x128xf32, #tpu.memory_space<vmem>>, vector<16x128xf32>
      tpu.vector_store %arg6[%c0_8, %c0_9], %11 {strides = array<i32>} : memref<16x128xf32, #tpu.memory_space<vmem>>, vector<16x128xf32>,
    } else {
    }
    %c0_i32_4 = arith.constant 0 : i32
    %6 = arith.cmpi ne, %arg2, %c0_i32_4 : i32
    %7 = arith.extui %6 : i1 to i32
    %c0_i32_5 = arith.constant 0 : i32
    %8 = arith.cmpi ne, %7, %c0_i32_5 : i32
    scf.if %8 {
      %c0_6 = arith.constant 0 : index
      %c0_7 = arith.constant 0 : index
      %9 = vector.load %arg6[%c0_6, %c0_7] : memref<16x128xf32, #tpu.memory_space<vmem>>, vector<16x128xf32>
      %10 = arith.addf %9, %2 : vector<16x128xf32>
      %c0_8 = arith.constant 0 : index
      %c0_9 = arith.constant 0 : index
      %11 = vector.load %arg6[%c0_8, %c0_9] : memref<16x128xf32, #tpu.memory_space<vmem>>, vector<16x128xf32>
      tpu.vector_store %arg6[%c0_8, %c0_9], %10 {strides = array<i32>} : memref<16x128xf32, #tpu.memory_space<vmem>>, vector<16x128xf32>,
    } else {
    }
    return
  }
  func.func @transform_0(%arg0: i32, %arg1: i32, %arg2: i32) -> (i32, i32) {
    %c0_i32 = arith.constant 0 : i32
    return %arg0, %arg2 : i32, i32
  }
  func.func @transform_1(%arg0: i32, %arg1: i32, %arg2: i32) -> (i32, i32) {
    %c0_i32 = arith.constant 0 : i32
    return %arg2, %arg1 : i32, i32
  }
  func.func @transform_2(%arg0: i32, %arg1: i32, %arg2: i32) -> (i32, i32) {
    %c0_i32 = arith.constant 0 : i32
    %c0_i32_0 = arith.constant 0 : i32
    return %c0_i32, %arg1 : i32, i32
  }
  func.func @transform_3(%arg0: i32, %arg1: i32, %arg2: i32) -> (i32, i32) {
    %c0_i32 = arith.constant 0 : i32
    return %arg0, %arg1 : i32, i32
  }
}

</mosaic_0001>

<llo_original>
// kernel: _linear_pallas.1
$region0: #{_linear_pallas.1}
  #allocation0 [shape = 'u32[]', space=smem, size = 0x4, offset = 0x4, fixed_abs, tag = 'smem constant byte address 0x4 - core index']
  #allocation1 [shape = 'u32[144,128]{1,0:T(1,128)}', space=vmem, size = 0x12000, scoped, tag = 'internal scratch']
  %s0 = inlined_call_operand.vmem [shape: bf16[16,8], index: 0, kind: input, shape index: {}]
  %s1 = inlined_call_operand.vmem [shape: bf16[8,128], index: 1, kind: input, shape index: {}]
  %s2 = inlined_call_operand.vmem [shape: f32[1,128], index: 2, kind: input, shape index: {}]
  %s3 = inlined_call_operand.hbm [shape: f32[16,128], index: 3, kind: output, shape index: {}]
  %s4 = sld [smem:[#allocation0]]
  $region30: #{_linear_pallas.1} parent=0
    _
  %s6 = ssub.s32 1, %s4
  %s7 = scalar_select 0, %s6, %s4
  $region1: #{_linear_pallas.1} parent=0
    #allocation2 [shape = 'u8[8192]{0}', space=vmem, size = 0x2000, scoped, tag = 'output window, operand 0, single buffered']
    #allocation3 [shape = 's32[1]{0}', space=sflag, size = 0x4, scoped, tag = 'scoped memory for _linear_pallas.1']
    %8 = vsyncpa [#allocation3], 0
    // Predicated region
    $region2: #{_linear_pallas.1} parent=1 // pred_check
      _
    $region3: #{_linear_pallas.1} parent=1 // pred_check_branch
      %10 = sbr.rel (0) target = $region5
    $region4: #{_linear_pallas.1} parent=1 // pred_region
      _
    $region5: #{_linear_pallas.1} parent=1 // pred_fallthru
      _
    // Predicated region
    $region6: #{_linear_pallas.1} parent=1 // pred_check
      _
    $region7: #{_linear_pallas.1} parent=1 // pred_check_branch
      %12 = sbr.rel (0) target = $region9
    $region8: #{_linear_pallas.1} parent=1 // pred_region
      _
    $region9: #{_linear_pallas.1} parent=1 // pred_fallthru
      _
    // Predicated region
    $region10: #{_linear_pallas.1} parent=1 // pred_check
      _
    $region11: #{_linear_pallas.1} parent=1 // pred_check_branch
      %14 = sbr.rel (0) target = $region13
    $region12: #{_linear_pallas.1} parent=1 // pred_region
      _
    $region13: #{_linear_pallas.1} parent=1 // pred_fallthru
      _
    %v16 = vld [vmem:[%s0] sm:$0xf]
    %v17 = vld [vmem:[%s0 + $0x4] sm:$0xf]
    %v18 = vld [vmem:[%s1] sm:$0xf]
    %v21 = vunpack.c.l.b16 %v16
    %v22 = vunpack.c.l.b16 %v17
    %v23 = vpack.c.b16 %v22, %v21
    %vm24 = vcmask 64512
    %v26 = vsel %vm24, %v23, 0
    %vm28 = vcmask 1043456
    %v30 = vsel %vm28, %v18, 0
    %32 = vmatprep.subr.bf16.mxu0 0
    %33 = vmatpush1.bf16.msra.mxu0 0
    %34 = vmatprep.subr.bf16.mxu0 0
    %35 = vmatpush1.bf16.msra.mxu0 0
    %36 = vmatprep.subr.bf16.mxu0 0
    %37 = vmatpush1.bf16.msra.mxu0 0
    %38 = vmatprep.subr.bf16.mxu0 0
    %39 = vmatpush1.bf16.msra.mxu0 0
    %40 = vmatprep.subr.bf16.mxu0 0
    %41 = vmatpush1.bf16.msra.mxu0 0
    %42 = vmatprep.subr.bf16.mxu0 0
    %43 = vmatpush1.bf16.msra.mxu0 0
    %44 = vmatprep.subr.bf16.mxu0 0
    %45 = vmatpush1.bf16.msra.mxu0 0
    %46 = vmatprep.subr.bf16.mxu0 0
    %47 = vmatpush1.bf16.msra.mxu0 %v30
    %48 = vmatprep.subr.bf16.mxu0 0
    %49 = vmatpush2.bf16.msra.mxu0 0
    %50 = vmatprep.subr.bf16.mxu0 0
    %51 = vmatpush2.bf16.msra.mxu0 0
    %52 = vmatprep.subr.bf16.mxu0 0
    %53 = vmatpush2.bf16.msra.mxu0 0
    %54 = vmatprep.subr.bf16.mxu0 0
    %55 = vmatpush2.bf16.msra.mxu0 0
    %56 = vmatprep.subr.bf16.mxu0 0
    %57 = vmatpush2.bf16.msra.mxu0 0
    %58 = vmatprep.subr.bf16.mxu0 0
    %59 = vmatpush2.bf16.msra.mxu0 0
    %60 = vmatprep.subr.bf16.mxu0 0
    %61 = vmatpush2.bf16.msra.mxu0 0
    %62 = vmatprep.subr.bf16.mxu0 0
    %63 = vmatpush2.bf16.msra.mxu0 0
    %64 = vmatprep.mubr.bf16.mxu0 0
    %65 = vmatmul.mubr.bf16.gmra.mxu0 %v26
    %v66 = vpop.f32.mrf.mxu0
    %v67 = vadd.f32 0.0, %v66
    %v68 = vpop.f32.mrf.mxu0
    %v69 = vpop.f32.mrf.mxu0
    %v70 = vadd.f32 0.0, %v69
    %v71 = vpop.f32.mrf.mxu0
    %72 = vdwg.mxu0
    %p73 = scmp.eq.s32.totalorder 0, 0
    // Predicated region
    $region14: #{_linear_pallas.1} parent=1 // pred_check
      %p74 = pneg %p73
    $region15: #{_linear_pallas.1} parent=1 // pred_check_branch
      %76 = sbr.rel (%p74) target = $region17
    $region16: #{_linear_pallas.1} parent=1 // pred_region
      %v77 = vld [vmem:[%s2] sm:$0x1]
      %v79 = vlaneseq
      %v80 = vshrl.u32 %v79, 7
      %v81 = vsub.s32 0, %v80
      %v82 = vrot.slane %v77, %v81
      %v84 = vadd.f32 %v67, %v82
      %v85 = vadd.f32 %v70, %v82
      %86 = vst [vmem:[#allocation2] sm:$0xff] %v84
      %87 = vst [vmem:[#allocation2 + $0x8] sm:$0xff] %v85
    $region17: #{_linear_pallas.1} parent=1 // pred_fallthru
      _
    %p88 = scmp.ne.s32.totalorder 0, 0
    // Predicated region
    $region18: #{_linear_pallas.1} parent=1 // pred_check
      %p89 = pneg %p88
    $region19: #{_linear_pallas.1} parent=1 // pred_check_branch
      %91 = sbr.rel (%p89) target = $region21
    $region20: #{_linear_pallas.1} parent=1 // pred_region
      %v92 = vld [vmem:[#allocation2] sm:$0xff]
      %v93 = vld [vmem:[#allocation2 + $0x8] sm:$0xff]
      %v94 = vadd.f32 %v92, %v67
      %v95 = vadd.f32 %v93, %v70
      %96 = vst [vmem:[#allocation2] sm:$0xff] %v94
      %97 = vst [vmem:[#allocation2 + $0x8] sm:$0xff] %v95
    $region21: #{_linear_pallas.1} parent=1 // pred_fallthru
      _
    // Predicated region
    $region22: #{_linear_pallas.1} parent=1 // pred_check
      _
    $region23: #{_linear_pallas.1} parent=1 // pred_check_branch
      %99 = sbr.rel (0) target = $region25
    $region24: #{_linear_pallas.1} parent=1 // pred_region
      %s101 = ssub.s32 256, 256
      %102 = vsyncadd [#allocation3], %s101
      %s103 = sshll.u32 [#allocation2], 4
      %s104 = int_to_ptr.vmem [resolvable:$true] %s103
      %109 = dma.vmem_to_hbm [thread:$0]  %s104, 256, %s3, [#allocation3], 128, 128, 8
    $region25: #{_linear_pallas.1} parent=1 // pred_fallthru
      _
    // Predicated region
    $region26: #{_linear_pallas.1} parent=1 // pred_check
      _
    $region27: #{_linear_pallas.1} parent=1 // pred_check_branch
      %111 = sbr.rel (0) target = $region29
    $region28: #{_linear_pallas.1} parent=1 // pred_region
      %112 = dma.done [#allocation3], 256
    $region29: #{_linear_pallas.1} parent=1 // pred_fallthru
      _
    %113 = vsyncpa [#allocation3], 1

</llo_original>
